<compile_context>
chip_gen: v7x
topology: tpu7x:2x2x1
jax: 0.10.0
libtpu: 0.0.40
codegen_flags: <defaults>
</compile_context>

<pallas_src>
import functools

import jax
import jax.numpy as jnp
from jax.experimental import pallas as pl
from jax.experimental.pallas import tpu as pltpu


# ---------------------------------------------------------------------------
# Hardware-aware helpers (trace-time Python, hoisted decisions).
# ---------------------------------------------------------------------------
def _vmem_capacity_bytes() -> int:
    try:
        return int(pltpu.get_tpu_info().vmem_capacity_bytes)
    except Exception:  # conservative fallback if the query is unavailable
        return 128 * 1024 * 1024


def _vmem_limit_bytes() -> int:
    # Leave ~16 MiB headroom for Mosaic internal scratch / semaphores:
    #   v7x (64 MiB physical)  -> 48 MiB
    #   v5e/v6e (128 MiB)      -> 112 MiB
    return int(min(_vmem_capacity_bytes() - 16 * 1024 * 1024,
                   112 * 1024 * 1024))


def _default_tile_n(d_model: int) -> int:
    """Lane-aligned N tile over the per-projection width.

    Largest multiple-of-128 divisor of d_model, capped at 2048 (1024 on
    64-MiB-VMEM parts). Falls back to the full d_model when it is not
    128-aligned (toy sizes), i.e. a single resident N block.
    """
    if d_model % 128 != 0:
        return d_model
    cap = 2048 if _vmem_capacity_bytes() >= 96 * 1024 * 1024 else 1024
    best = 128
    for tn in range(128, min(d_model, cap) + 1, 128):
        if d_model % tn == 0:
            best = tn
    return best


# ---------------------------------------------------------------------------
# One-time parameter prep (hoisted out of the forward path).
# ---------------------------------------------------------------------------
def fuse_params(params, d_model, *, compute_dtype=jnp.bfloat16, tile_n=None):
    """Fuse + interleave Q/K/V Linear params for the kernel.

    params: PyTorch-style Linear params: W (out, in), b (out,).
    Returns:
      w_qkv (d_model, 3*d_model), dtype=compute_dtype.  For N block j of width
        tile_n its columns are [Wq^T[:, j] | Wk^T[:, j] | Wv^T[:, j]].
      b_qkv (1, 3*d_model) float32, same interleave.
    NOTE: the same `tile_n` (or both left as default) must be used when
    calling multi_head_attention_qkv.
    """
    tn = _default_tile_n(d_model) if tile_n is None else int(tile_n)
    assert d_model % tn == 0
    nt = d_model // tn

    wt = jnp.stack([params["wq"].T, params["wk"].T, params["wv"].T], axis=0)
    # (3, D, D) -> (D, nt, 3, tn) -> (D, 3D): column block j holds the j-th
    # tile_n-wide column slice of each of Wq^T, Wk^T, Wv^T, back to back.
    w_qkv = (wt.reshape(3, d_model, nt, tn)
               .transpose(1, 2, 0, 3)
               .reshape(d_model, 3 * d_model)
               .astype(compute_dtype))

    bt = jnp.stack([params["bq"], params["bk"], params["bv"]], axis=0)  # (3, D)
    b_qkv = (bt.reshape(3, nt, tn)
               .transpose(1, 0, 2)
               .reshape(1, 3 * d_model)
               .astype(jnp.float32))          # bias kept f32 (tiny, exact add)
    return {"w_qkv": w_qkv, "b_qkv": b_qkv}


# ---------------------------------------------------------------------------
# Kernel.
# ---------------------------------------------------------------------------
def _qkv_fused_kernel(x_ref, w_ref, b_ref, q_ref, k_ref, v_ref, *, tile_n):
    """One fused QKV GEMM tile.

    x_ref : (tile_m, D)       activations (cast to the weight dtype -> MXU bf16)
    w_ref : (D, 3*tile_n)     interleaved [Wq^T_j | Wk^T_j | Wv^T_j] block
    b_ref : (1, 3*tile_n)     matching interleaved bias block (f32)
    q/k/v : (tile_m, tile_n)  lane-dense output blocks
    """
    x = x_ref[...].astype(w_ref.dtype)                 # bf16 inputs on the MXU
    slab = jnp.dot(x, w_ref[...], preferred_element_type=jnp.float32)
    slab = slab + b_ref[...]                           # f32 bias add
    q_ref[...] = slab[:, :tile_n].astype(q_ref.dtype)
    k_ref[...] = slab[:, tile_n:2 * tile_n].astype(k_ref.dtype)
    v_ref[...] = slab[:, 2 * tile_n:].astype(v_ref.dtype)


# ---------------------------------------------------------------------------
# Forward wrapper (replicates MultiHeadAttention.forward(emb) -> (q, k, v)).
# ---------------------------------------------------------------------------
@functools.partial(
    jax.jit,
    static_argnames=("n_head", "tile_m", "tile_n", "out_dtype",
                     "single_buffer_weights"),
)
def multi_head_attention_qkv(emb, fused_params, n_head, *, tile_m=None,
                             tile_n=None, out_dtype=None,
                             single_buffer_weights=True):
    """emb: (B, S, d_model).  Returns q, k, v of shape (B, n_head, S, d_head),
    using the PyTorch raw `.view(B, n_head, S, d_head)` semantics (no transpose).
    """
    B, S, D = emb.shape
    assert D % n_head == 0
    d_head = D // n_head
    M = B * S

    w = fused_params["w_qkv"]                   # (D, 3D) interleaved, bf16/f32
    b = fused_params["b_qkv"]                   # (1, 3D) f32
    assert w.shape == (D, 3 * D) and b.shape == (1, 3 * D)

    tn = _default_tile_n(D) if tile_n is None else int(tile_n)
    assert D % tn == 0, "tile_n must divide d_model (and match fuse_params)"
    nt = D // tn

    out_dtype = emb.dtype if out_dtype is None else jnp.dtype(out_dtype)

    # M tile: multiple of 16 (bf16 sublane packing); bigger on 128-MiB parts.
    if tile_m is None:
        tile_m = 1024 if _vmem_capacity_bytes() >= 96 * 1024 * 1024 else 512
    tile_m = max(16, (int(tile_m) // 16) * 16)
    if tile_m >= M:
        tile_m = M                              # single full-extent block
    m_tiles = pl.cdiv(M, tile_m)                # ragged last block: masked stores

    x2d = emb.reshape(M, D)                     # free view

    # Single-buffer the fused weight/bias when they are grid-resident
    # (constant index_map) -> no wasted second VMEM buffer.
    w_pipe = (pl.Buffered(buffer_count=1)
              if (nt == 1 and single_buffer_weights) else None)

    def _spec(shape, index_map, pipeline_mode=None):
        if pipeline_mode is None:
            return pl.BlockSpec(shape, index_map)
        return pl.BlockSpec(shape, index_map, pipeline_mode=pipeline_mode)

    flops = 2 * M * D * 3 * D
    bytes_accessed = (M * D * x2d.dtype.itemsize
                      + w.size * w.dtype.itemsize
                      + b.size * b.dtype.itemsize
                      + 3 * M * D * out_dtype.itemsize)

    out_sds = jax.ShapeDtypeStruct((M, D), out_dtype)

    # Grid: N axis OUTER (weight block DMA'd once), M axis INNER (streams).
    q2d, k2d, v2d = pl.pallas_call(
        functools.partial(_qkv_fused_kernel, tile_n=tn),
        out_shape=(out_sds, out_sds, out_sds),
        grid_spec=pltpu.PrefetchScalarGridSpec(
            num_scalar_prefetch=0,
            grid=(nt, m_tiles),
            in_specs=[
                _spec((tile_m, D), lambda n, m: (m, 0)),         # x tile
                _spec((D, 3 * tn), lambda n, m: (0, n), w_pipe), # fused W block
                _spec((1, 3 * tn), lambda n, m: (0, n), w_pipe), # fused b block
            ],
            out_specs=[
                pl.BlockSpec((tile_m, tn), lambda n, m: (m, n)),
                pl.BlockSpec((tile_m, tn), lambda n, m: (m, n)),
                pl.BlockSpec((tile_m, tn), lambda n, m: (m, n)),
            ],
        ),
        compiler_params=pltpu.CompilerParams(
            dimension_semantics=("parallel", "parallel"),  # megacore-shardable
            vmem_limit_bytes=_vmem_limit_bytes(),
        ),
        cost_estimate=pl.CostEstimate(flops=flops, transcendentals=0,
                                      bytes_accessed=bytes_accessed),
    )(x2d, w, b)

    # div_and_sort_for_multiheads: raw view (B*S, D) -> (B, n_head, S, d_head),
    # exactly PyTorch's `.view(...)` (no transpose) -- a free reshape here.
    q = q2d.reshape(B, n_head, S, d_head)
    k = k2d.reshape(B, n_head, S, d_head)
    v = v2d.reshape(B, n_head, S, d_head)
    return q, k, v


# ---------------------------------------------------------------------------
# Test scaffolding.
# ---------------------------------------------------------------------------
def init_params(key, d_model):
    """Deterministic synthetic params (PyTorch Linear shapes: W (out,in), b (out,))."""
    ks = jax.random.split(key, 6)
    scale = 1.0 / jnp.sqrt(d_model)
    return {
        "wq": jax.random.uniform(ks[0], (d_model, d_model), jnp.float32, -scale, scale),
        "bq": jax.random.uniform(ks[1], (d_model,), jnp.float32, -scale, scale),
        "wk": jax.random.uniform(ks[2], (d_model, d_model), jnp.float32, -scale, scale),
        "bk": jax.random.uniform(ks[3], (d_model,), jnp.float32, -scale, scale),
        "wv": jax.random.uniform(ks[4], (d_model, d_model), jnp.float32, -scale, scale),
        "bv": jax.random.uniform(ks[5], (d_model,), jnp.float32, -scale, scale),
    }


def _reference(emb, params, n_head, compute_dtype=jnp.float32):
    """Plain JAX mirror of the PyTorch forward (optionally bf16-quantized inputs)."""
    B, S, D = emb.shape
    d_head = D // n_head

    def lin(x, w, bias):
        xq = x.astype(compute_dtype).astype(jnp.float32)
        wq = w.astype(compute_dtype).astype(jnp.float32)
        return xq @ wq.T + bias

    q = lin(emb, params["wq"], params["bq"]).reshape(B, n_head, S, d_head)
    k = lin(emb, params["wk"], params["bk"]).reshape(B, n_head, S, d_head)
    v = lin(emb, params["wv"], params["bv"]).reshape(B, n_head, S, d_head)
    return q, k, v


if __name__ == "__main__":
    key = jax.random.PRNGKey(0)
    k_emb, k_params, k_params2, k_emb2, k_emb3 = jax.random.split(key, 5)

    B, S, d_model, n_head = 2, 8, 32, 4
    emb = jax.random.normal(k_emb, (B, S, d_model), jnp.float32)
    params = init_params(k_params, d_model)

    # --- 1) Default path: bf16 MXU inputs, f32 accumulation, f32 outputs. ---
    fused_bf16 = fuse_params(params, d_model)            # bf16 fused weights
    try:
        q, k, v = multi_head_attention_qkv(emb, fused_bf16, n_head)
        jax.block_until_ready((q, k, v))
        sbw = True
    except Exception:
        # Fallback if this jax build rejects pl.Buffered on pallas_call
        # BlockSpecs; only costs one extra VMEM weight buffer.
        sbw = False
        q, k, v = multi_head_attention_qkv(emb, fused_bf16, n_head,
                                           single_buffer_weights=False)
        jax.block_until_ready((q, k, v))

    qb, kb, vb = _reference(emb, params, n_head, compute_dtype=jnp.bfloat16)
    assert q.shape == (B, n_head, S, d_model // n_head)
    assert jnp.allclose(q, qb, atol=1e-4, rtol=1e-4)
    assert jnp.allclose(k, kb, atol=1e-4, rtol=1e-4)
    assert jnp.allclose(v, vb, atol=1e-4, rtol=1e-4)

    # --- 2) Exact f32 path (matches the float32 PyTorch reference tightly). ---
    fused_f32 = fuse_params(params, d_model, compute_dtype=jnp.float32)
    q2, k2, v2 = multi_head_attention_qkv(emb, fused_f32, n_head, tile_m=16,
                                          single_buffer_weights=sbw)
    jax.block_until_ready((q2, k2, v2))
    qr, kr, vr = _reference(emb, params, n_head)
    assert jnp.allclose(q2, qr, atol=1e-5)
    assert jnp.allclose(k2, kr, atol=1e-5)
    assert jnp.allclose(v2, vr, atol=1e-5)

    # --- 3) N-tiled path (tile_n=128, 2 N blocks) with interleaved weights. ---
    d_model2, n_head2 = 256, 4
    params2 = init_params(k_params2, d_model2)
    fused2 = fuse_params(params2, d_model2, tile_n=128)
    emb2 = jax.random.normal(k_emb2, (2, 8, d_model2), jnp.float32)
    q3, k3, v3 = multi_head_attention_qkv(emb2, fused2, n_head2, tile_n=128,
                                          single_buffer_weights=sbw)
    jax.block_until_ready((q3, k3, v3))
    qb3, kb3, vb3 = _reference(emb2, params2, n_head2, compute_dtype=jnp.bfloat16)
    assert jnp.allclose(q3, qb3, atol=1e-4, rtol=1e-4)
    assert jnp.allclose(k3, kb3, atol=1e-4, rtol=1e-4)
    assert jnp.allclose(v3, vb3, atol=1e-4, rtol=1e-4)

    # --- 4) Ragged M (no pad/slice): M=18 with tile_m=16 -> masked edge block. ---
    emb3 = jax.random.normal(k_emb3, (2, 9, d_model), jnp.float32)
    q4, k4, v4 = multi_head_attention_qkv(emb3, fused_bf16, n_head, tile_m=16,
                                          single_buffer_weights=sbw)
    jax.block_until_ready((q4, k4, v4))
    qb4, kb4, vb4 = _reference(emb3, params, n_head, compute_dtype=jnp.bfloat16)
    assert jnp.allclose(q4, qb4, atol=1e-4, rtol=1e-4)
    assert jnp.allclose(k4, kb4, atol=1e-4, rtol=1e-4)
    assert jnp.allclose(v4, vb4, atol=1e-4, rtol=1e-4)

    # --- 5) bf16 outputs for bf16 downstream attention (halved writeback). ---
    q5, k5, v5 = multi_head_attention_qkv(emb, fused_bf16, n_head,
                                          out_dtype=jnp.bfloat16,
                                          single_buffer_weights=sbw)
    jax.block_until_ready((q5, k5, v5))
    assert q5.dtype == jnp.bfloat16
    assert jnp.allclose(q5.astype(jnp.float32), qb, atol=2e-2, rtol=2e-2)
    assert jnp.allclose(v5.astype(jnp.float32), vb, atol=2e-2, rtol=2e-2)

    print("KERNEL_OK")
</pallas_src>

<mosaic_0001>
module attributes {stable_mosaic.version = 11 : i64} {
  func.func @_qkv_fused_kernel(%arg0: i32, %arg1: i32, %arg2: memref<16x32xf32, #tpu.memory_space<vmem>>, %arg3: memref<32x96xbf16, #tpu.memory_space<vmem>>, %arg4: memref<1x96xf32, #tpu.memory_space<vmem>>, %arg5: memref<16x32xf32, #tpu.memory_space<vmem>>, %arg6: memref<16x32xf32, #tpu.memory_space<vmem>>, %arg7: memref<16x32xf32, #tpu.memory_space<vmem>>) attributes {dimension_semantics = [#tpu.dimension_semantics<parallel>, #tpu.dimension_semantics<parallel>], iteration_bounds = array<i64: 1, 1>, scalar_prefetch = 0 : i64, scratch_operands = 0 : i64, tpu.core_type = #tpu.core_type<tc>, window_params = [{transform_indices = @transform_0, window_bounds = array<i64: 16, 32>}, {pipeline_mode = #tpu.pipeline_mode<synchronous>, transform_indices = @transform_1, window_bounds = array<i64: 32, 96>}, {pipeline_mode = #tpu.pipeline_mode<synchronous>, transform_indices = @transform_2, window_bounds = array<i64: 1, 96>}, {transform_indices = @transform_3, window_bounds = array<i64: 16, 32>}, {transform_indices = @transform_4, window_bounds = array<i64: 16, 32>}, {transform_indices = @transform_5, window_bounds = array<i64: 16, 32>}]} {
    %c0 = arith.constant 0 : index
    %c0_0 = arith.constant 0 : index
    %0 = vector.load %arg2[%c0, %c0_0] : memref<16x32xf32, #tpu.memory_space<vmem>>, vector<16x32xf32>
    %1 = arith.truncf %0 : vector<16x32xf32> to vector<16x32xbf16>
    %c0_1 = arith.constant 0 : index
    %c0_2 = arith.constant 0 : index
    %2 = vector.load %arg3[%c0_1, %c0_2] : memref<32x96xbf16, #tpu.memory_space<vmem>>, vector<32x96xbf16>
    %cst = arith.constant dense<0.000000e+00> : vector<16x96xf32>
    %3 = tpu.matmul %1, %2, %cst {dimension_numbers = #tpu.dot_dimension_numbers<[1], [0], [0], [1], [0, 0, 1, 1], [], []>} : vector<16x32xbf16>, vector<32x96xbf16>, vector<16x96xf32> -> vector<16x96xf32>
    %c0_3 = arith.constant 0 : index
    %c0_4 = arith.constant 0 : index
    %4 = vector.load %arg4[%c0_3, %c0_4] : memref<1x96xf32, #tpu.memory_space<vmem>>, vector<1x96xf32>
    %5 = vector.broadcast %4 : vector<1x96xf32> to vector<16x96xf32>
    %6 = arith.addf %3, %5 : vector<16x96xf32>
    %7 = vector.extract_strided_slice %6 {offsets = [0, 0], sizes = [16, 32], strides = [1, 1]} : vector<16x96xf32> to vector<16x32xf32>
    %c0_5 = arith.constant 0 : index
    %c0_6 = arith.constant 0 : index
    %8 = vector.load %arg5[%c0_5, %c0_6] : memref<16x32xf32, #tpu.memory_space<vmem>>, vector<16x32xf32>
    tpu.vector_store %arg5[%c0_5, %c0_6], %7 {strides = array<i32>} : memref<16x32xf32, #tpu.memory_space<vmem>>, vector<16x32xf32>,
    %9 = vector.extract_strided_slice %6 {offsets = [0, 32], sizes = [16, 32], strides = [1, 1]} : vector<16x96xf32> to vector<16x32xf32>
    %c0_7 = arith.constant 0 : index
    %c0_8 = arith.constant 0 : index
    %10 = vector.load %arg6[%c0_7, %c0_8] : memref<16x32xf32, #tpu.memory_space<vmem>>, vector<16x32xf32>
    tpu.vector_store %arg6[%c0_7, %c0_8], %9 {strides = array<i32>} : memref<16x32xf32, #tpu.memory_space<vmem>>, vector<16x32xf32>,
    %11 = vector.extract_strided_slice %6 {offsets = [0, 64], sizes = [16, 32], strides = [1, 1]} : vector<16x96xf32> to vector<16x32xf32>
    %c0_9 = arith.constant 0 : index
    %c0_10 = arith.constant 0 : index
    %12 = vector.load %arg7[%c0_9, %c0_10] : memref<16x32xf32, #tpu.memory_space<vmem>>, vector<16x32xf32>
    tpu.vector_store %arg7[%c0_9, %c0_10], %11 {strides = array<i32>} : memref<16x32xf32, #tpu.memory_space<vmem>>, vector<16x32xf32>,
    return
  }
  func.func @transform_0(%arg0: i32, %arg1: i32) -> (i32, i32) {
    %c0_i32 = arith.constant 0 : i32
    %c0_i32_0 = arith.constant 0 : i32
    return %arg1, %c0_i32 : i32, i32
  }
  func.func @transform_1(%arg0: i32, %arg1: i32) -> (i32, i32) {
    %c0_i32 = arith.constant 0 : i32
    %c0_i32_0 = arith.constant 0 : i32
    return %c0_i32, %arg0 : i32, i32
  }
  func.func @transform_2(%arg0: i32, %arg1: i32) -> (i32, i32) {
    %c0_i32 = arith.constant 0 : i32
    %c0_i32_0 = arith.constant 0 : i32
    return %c0_i32, %arg0 : i32, i32
  }
  func.func @transform_3(%arg0: i32, %arg1: i32) -> (i32, i32) {
    %c0_i32 = arith.constant 0 : i32
    return %arg1, %arg0 : i32, i32
  }
  func.func @transform_4(%arg0: i32, %arg1: i32) -> (i32, i32) {
    %c0_i32 = arith.constant 0 : i32
    return %arg1, %arg0 : i32, i32
  }
  func.func @transform_5(%arg0: i32, %arg1: i32) -> (i32, i32) {
    %c0_i32 = arith.constant 0 : i32
    return %arg1, %arg0 : i32, i32
  }
}

module attributes {stable_mosaic.version = 11 : i64} {
  func.func @_qkv_fused_kernel(%arg0: i32, %arg1: i32, %arg2: memref<16x32xf32, #tpu.memory_space<vmem>>, %arg3: memref<32x96xbf16, #tpu.memory_space<vmem>>, %arg4: memref<1x96xf32, #tpu.memory_space<vmem>>, %arg5: memref<16x32xf32, #tpu.memory_space<vmem>>, %arg6: memref<16x32xf32, #tpu.memory_space<vmem>>, %arg7: memref<16x32xf32, #tpu.memory_space<vmem>>) attributes {dimension_semantics = [#tpu.dimension_semantics<parallel>, #tpu.dimension_semantics<parallel>], iteration_bounds = array<i64: 1, 1>, scalar_prefetch = 0 : i64, scratch_operands = 0 : i64, tpu.core_type = #tpu.core_type<tc>, window_params = [{transform_indices = @transform_0, window_bounds = array<i64: 16, 32>}, {transform_indices = @transform_1, window_bounds = array<i64: 32, 96>}, {transform_indices = @transform_2, window_bounds = array<i64: 1, 96>}, {transform_indices = @transform_3, window_bounds = array<i64: 16, 32>}, {transform_indices = @transform_4, window_bounds = array<i64: 16, 32>}, {transform_indices = @transform_5, window_bounds = array<i64: 16, 32>}]} {
    %c0 = arith.constant 0 : index
    %c0_0 = arith.constant 0 : index
    %0 = vector.load %arg2[%c0, %c0_0] : memref<16x32xf32, #tpu.memory_space<vmem>>, vector<16x32xf32>
    %1 = arith.truncf %0 : vector<16x32xf32> to vector<16x32xbf16>
    %c0_1 = arith.constant 0 : index
    %c0_2 = arith.constant 0 : index
    %2 = vector.load %arg3[%c0_1, %c0_2] : memref<32x96xbf16, #tpu.memory_space<vmem>>, vector<32x96xbf16>
    %cst = arith.constant dense<0.000000e+00> : vector<16x96xf32>
    %3 = tpu.matmul %1, %2, %cst {dimension_numbers = #tpu.dot_dimension_numbers<[1], [0], [0], [1], [0, 0, 1, 1], [], []>} : vector<16x32xbf16>, vector<32x96xbf16>, vector<16x96xf32> -> vector<16x96xf32>
    %c0_3 = arith.constant 0 : index
    %c0_4 = arith.constant 0 : index
    %4 = vector.load %arg4[%c0_3, %c0_4] : memref<1x96xf32, #tpu.memory_space<vmem>>, vector<1x96xf32>
    %5 = vector.broadcast %4 : vector<1x96xf32> to vector<16x96xf32>
    %6 = arith.addf %3, %5 : vector<16x96xf32>
    %7 = vector.extract_strided_slice %6 {offsets = [0, 0], sizes = [16, 32], strides = [1, 1]} : vector<16x96xf32> to vector<16x32xf32>
    %c0_5 = arith.constant 0 : index
    %c0_6 = arith.constant 0 : index
    %8 = vector.load %arg5[%c0_5, %c0_6] : memref<16x32xf32, #tpu.memory_space<vmem>>, vector<16x32xf32>
    tpu.vector_store %arg5[%c0_5, %c0_6], %7 {strides = array<i32>} : memref<16x32xf32, #tpu.memory_space<vmem>>, vector<16x32xf32>,
    %9 = vector.extract_strided_slice %6 {offsets = [0, 32], sizes = [16, 32], strides = [1, 1]} : vector<16x96xf32> to vector<16x32xf32>
    %c0_7 = arith.constant 0 : index
    %c0_8 = arith.constant 0 : index
    %10 = vector.load %arg6[%c0_7, %c0_8] : memref<16x32xf32, #tpu.memory_space<vmem>>, vector<16x32xf32>
    tpu.vector_store %arg6[%c0_7, %c0_8], %9 {strides = array<i32>} : memref<16x32xf32, #tpu.memory_space<vmem>>, vector<16x32xf32>,
    %11 = vector.extract_strided_slice %6 {offsets = [0, 64], sizes = [16, 32], strides = [1, 1]} : vector<16x96xf32> to vector<16x32xf32>
    %c0_9 = arith.constant 0 : index
    %c0_10 = arith.constant 0 : index
    %12 = vector.load %arg7[%c0_9, %c0_10] : memref<16x32xf32, #tpu.memory_space<vmem>>, vector<16x32xf32>
    tpu.vector_store %arg7[%c0_9, %c0_10], %11 {strides = array<i32>} : memref<16x32xf32, #tpu.memory_space<vmem>>, vector<16x32xf32>,
    return
  }
  func.func @transform_0(%arg0: i32, %arg1: i32) -> (i32, i32) {
    %c0_i32 = arith.constant 0 : i32
    %c0_i32_0 = arith.constant 0 : i32
    return %arg1, %c0_i32 : i32, i32
  }
  func.func @transform_1(%arg0: i32, %arg1: i32) -> (i32, i32) {
    %c0_i32 = arith.constant 0 : i32
    %c0_i32_0 = arith.constant 0 : i32
    return %c0_i32, %arg0 : i32, i32
  }
  func.func @transform_2(%arg0: i32, %arg1: i32) -> (i32, i32) {
    %c0_i32 = arith.constant 0 : i32
    %c0_i32_0 = arith.constant 0 : i32
    return %c0_i32, %arg0 : i32, i32
  }
  func.func @transform_3(%arg0: i32, %arg1: i32) -> (i32, i32) {
    %c0_i32 = arith.constant 0 : i32
    return %arg1, %arg0 : i32, i32
  }
  func.func @transform_4(%arg0: i32, %arg1: i32) -> (i32, i32) {
    %c0_i32 = arith.constant 0 : i32
    return %arg1, %arg0 : i32, i32
  }
  func.func @transform_5(%arg0: i32, %arg1: i32) -> (i32, i32) {
    %c0_i32 = arith.constant 0 : i32
    return %arg1, %arg0 : i32, i32
  }
}

</mosaic_0001>

<llo_original>
// kernel: multi_head_attention_qkv.1
$region0: #{multi_head_attention_qkv.1}
  #allocation0 [shape = 'u32[]', space=smem, size = 0x4, offset = 0x4, fixed_abs, tag = 'smem constant byte address 0x4 - core index']
  #allocation1 [shape = 'u32[144,128]{1,0:T(1,128)}', space=vmem, size = 0x12000, scoped, tag = 'internal scratch']
  %s0 = inlined_call_operand.hbm [shape: f32[16,32], index: 0, kind: input, shape index: {}]
  %s1 = inlined_call_operand.hbm [shape: bf16[32,96], index: 1, kind: input, shape index: {}]
  %s2 = inlined_call_operand.hbm [shape: f32[1,96], index: 2, kind: input, shape index: {}]
  %s3 = inlined_call_operand.hbm [shape: f32[16,32], index: 3, kind: output, shape index: {0}]
  %s4 = inlined_call_operand.hbm [shape: f32[16,32], index: 4, kind: output, shape index: {1}]
  %s5 = inlined_call_operand.hbm [shape: f32[16,32], index: 5, kind: output, shape index: {2}]
  %6 = xla_tuple %s3, %s4, %s5
  %s7 = sld [smem:[#allocation0]]
  $region50: #{multi_head_attention_qkv.1} parent=0
    _
  %s9 = ssub.s32 1, %s7
  %s10 = scalar_select 0, %s9, %s7
  $region1: #{multi_head_attention_qkv.1} parent=0
    #allocation2 [shape = 'u8[8192]{0}', space=vmem, size = 0x2000, scoped, tag = 'input window, operand 0, single buffered']
    #allocation3 [shape = 's32[1]{0}', space=sflag, size = 0x4, scoped, tag = 'scoped memory for multi_head_attention_qkv.1']
    #allocation4 [shape = 's32[1]{0}', space=sflag, size = 0x4, scoped, tag = 'scoped memory for multi_head_attention_qkv.1']
    #allocation5 [shape = 'u8[8192]{0}', space=vmem, size = 0x2000, scoped, tag = 'input window, operand 1, single buffered']
    #allocation6 [shape = 's32[1]{0}', space=sflag, size = 0x4, scoped, tag = 'scoped memory for multi_head_attention_qkv.1']
    #allocation7 [shape = 'u8[512]{0}', space=vmem, size = 0x400, scoped, tag = 'input window, operand 2, single buffered']
    #allocation8 [shape = 'u8[8192]{0}', space=vmem, size = 0x2000, scoped, tag = 'output window, operand 0, single buffered']
    #allocation9 [shape = 'u8[8192]{0}', space=vmem, size = 0x2000, scoped, tag = 'output window, operand 1, single buffered']
    #allocation10 [shape = 's32[1]{0}', space=sflag, size = 0x4, scoped, tag = 'scoped memory for multi_head_attention_qkv.1']
    #allocation11 [shape = 'u8[8192]{0}', space=vmem, size = 0x2000, scoped, tag = 'output window, operand 2, single buffered']
    %11 = vsyncpa [#allocation3], 0
    %12 = vsyncpa [#allocation6], 0
    %13 = vsyncpa [#allocation4], 0
    %14 = vsyncpa [#allocation10], 0
    // Predicated region
    $region2: #{multi_head_attention_qkv.1} parent=1 // pred_check
      _
    $region3: #{multi_head_attention_qkv.1} parent=1 // pred_check_branch
      %16 = sbr.rel (0) target = $region5
    $region4: #{multi_head_attention_qkv.1} parent=1 // pred_region
      %s18 = ssub.s32 256, 256
      %19 = vsyncadd [#allocation3], %s18
      %s20 = sshll.u32 [#allocation2], 4
      %s21 = int_to_ptr.vmem [resolvable:$true] %s20
      %26 = dma.hbm_to_vmem [thread:$0]  %s0, 256, %s21, [#allocation3], 128, 128, 8
    $region5: #{multi_head_attention_qkv.1} parent=1 // pred_fallthru
      _
    // Predicated region
    $region6: #{multi_head_attention_qkv.1} parent=1 // pred_check
      _
    $region7: #{multi_head_attention_qkv.1} parent=1 // pred_check_branch
      %28 = sbr.rel (0) target = $region9
    $region8: #{multi_head_attention_qkv.1} parent=1 // pred_region
      %s30 = ssub.s32 256, 256
      %31 = vsyncadd [#allocation6], %s30
      %s32 = sshll.u32 [#allocation5], 4
      %s33 = int_to_ptr.vmem [resolvable:$true] %s32
      %38 = dma.hbm_to_vmem [thread:$0]  %s1, 256, %s33, [#allocation6], 64, 64, 4
    $region9: #{multi_head_attention_qkv.1} parent=1 // pred_fallthru
      _
    // Predicated region
    $region10: #{multi_head_attention_qkv.1} parent=1 // pred_check
      _
    $region11: #{multi_head_attention_qkv.1} parent=1 // pred_check_branch
      %40 = sbr.rel (0) target = $region13
    $region12: #{multi_head_attention_qkv.1} parent=1 // pred_region
      %s42 = ssub.s32 16, 16
      %43 = vsyncadd [#allocation6], %s42
      %s45 = sshll.u32 [#allocation7], 4
      %s46 = int_to_ptr.vmem [resolvable:$true] %s45
      %48 = dma.hbm_to_vmem [thread:$0]  %s2, 16, %s46, [#allocation6]
    $region13: #{multi_head_attention_qkv.1} parent=1 // pred_fallthru
      _
    // Predicated region
    $region14: #{multi_head_attention_qkv.1} parent=1 // pred_check
      _
    $region15: #{multi_head_attention_qkv.1} parent=1 // pred_check_branch
      %50 = sbr.rel (0) target = $region17
    $region16: #{multi_head_attention_qkv.1} parent=1 // pred_region
      %51 = dma.done [#allocation3], 256
    $region17: #{multi_head_attention_qkv.1} parent=1 // pred_fallthru
      _
    // Predicated region
    $region18: #{multi_head_attention_qkv.1} parent=1 // pred_check
      _
    $region19: #{multi_head_attention_qkv.1} parent=1 // pred_check_branch
      %53 = sbr.rel (0) target = $region21
    $region20: #{multi_head_attention_qkv.1} parent=1 // pred_region
      %54 = dma.done [#allocation6], 256
    $region21: #{multi_head_attention_qkv.1} parent=1 // pred_fallthru
      _
    // Predicated region
    $region22: #{multi_head_attention_qkv.1} parent=1 // pred_check
      _
    $region23: #{multi_head_attention_qkv.1} parent=1 // pred_check_branch
      %56 = sbr.rel (0) target = $region25
    $region24: #{multi_head_attention_qkv.1} parent=1 // pred_region
      %57 = dma.done [#allocation6], 16
    $region25: #{multi_head_attention_qkv.1} parent=1 // pred_fallthru
      _
    %v59 = vld [vmem:[#allocation2] sm:$0xff]
    %v60 = vld [vmem:[#allocation2 + $0x8] sm:$0xff]
    %v61 = vpack.c.bf16 %v60, %v59
    %v62 = vld [vmem:[#allocation5] sm:$0xf]
    %v63 = vld [vmem:[#allocation5 + $0x4] sm:$0xf]
    %v64 = vld [vmem:[#allocation5 + $0x8] sm:$0xf]
    %v65 = vld [vmem:[#allocation5 + $0xc] sm:$0xf]
    %v66 = vld [vmem:[#allocation7] sm:$0x1]
    %v68 = vlaneseq
    %v69 = vshrl.u32 %v68, 7
    %v70 = vsub.s32 0, %v69
    %v71 = vrot.slane %v66, %v70
    %v77 = vunpack.c.l.b16 %v62
    %v78 = vunpack.c.l.b16 %v63
    %v79 = vunpack.c.l.b16 %v64
    %v80 = vunpack.c.l.b16 %v65
    %v81 = vpack.c.b16 %v78, %v77
    %v82 = vpack.c.b16 %v80, %v79
    %vm85 = vcmask 261120
    %v87 = vsel %vm85, %v61, 0
    %89 = vmatprep.subr.bf16.mxu0 0
    %90 = vmatpush1.bf16.msra.mxu0 %v81
    %91 = vmatprep.subr.bf16.mxu0 0
    %92 = vmatpush1.bf16.msra.mxu0 %v82
    %93 = vmatprep.subr.bf16.mxu0 0
    %94 = vmatpush1.bf16.msra.mxu0 0
    %95 = vmatprep.subr.bf16.mxu0 0
    %96 = vmatpush1.bf16.msra.mxu0 0
    %97 = vmatprep.subr.bf16.mxu0 0
    %98 = vmatpush1.bf16.msra.mxu0 0
    %99 = vmatprep.subr.bf16.mxu0 0
    %100 = vmatpush1.bf16.msra.mxu0 0
    %101 = vmatprep.subr.bf16.mxu0 0
    %102 = vmatpush1.bf16.msra.mxu0 0
    %103 = vmatprep.subr.bf16.mxu0 0
    %104 = vmatpush1.bf16.msra.mxu0 0
    %105 = vmatprep.subr.bf16.mxu0 0
    %106 = vmatpush1.bf16.msra.mxu0 0
    %107 = vmatprep.subr.bf16.mxu0 0
    %108 = vmatpush1.bf16.msra.mxu0 0
    %109 = vmatprep.subr.bf16.mxu0 0
    %110 = vmatpush1.bf16.msra.mxu0 0
    %111 = vmatprep.subr.bf16.mxu0 0
    %112 = vmatpush1.bf16.msra.mxu0 0
    %113 = vmatprep.subr.bf16.mxu0 0
    %114 = vmatpush1.bf16.msra.mxu0 0
    %115 = vmatprep.subr.bf16.mxu0 0
    %116 = vmatpush1.bf16.msra.mxu0 0
    %117 = vmatprep.subr.bf16.mxu0 0
    %118 = vmatpush1.bf16.msra.mxu0 0
    %119 = vmatprep.subr.bf16.mxu0 0
    %120 = vmatpush1.bf16.msra.mxu0 0
    %121 = vmatprep.mubr.bf16.mxu0 0
    %122 = vmatmul.mubr.bf16.gmra.mrb[0].mxu0 %v87
    %v123 = vpop.f32.mrb[0].mxu0
    %v124 = vadd.f32 %v71, %v123
    %v125 = vpop.f32.mrb[0].mxu0
    %v126 = vpop.f32.mrb[0].mxu0
    %v127 = vadd.f32 %v71, %v126
    %v128 = vpop.f32.mrb[0].mxu0
    %129 = vdwg.mxu0
    %130 = vst.msk [vmem:[#allocation8] sm:$0xff] %vm85, %v124
    %131 = vst.msk [vmem:[#allocation8 + $0x8] sm:$0xff] %vm85, %v127
    %134 = vrot.lane.b32.xlu0 %v124, 96
    %v135 = vpop.permute.xlu0 %134
    %136 = vrot.lane.b32.xlu0 %v127, 96
    %v137 = vpop.permute.xlu0 %136
    %140 = vst.msk [vmem:[#allocation9] sm:$0xff] %vm85, %v135
    %141 = vst.msk [vmem:[#allocation9 + $0x8] sm:$0xff] %vm85, %v137
    %142 = vrot.lane.b32.xlu0 %v124, 64
    %v143 = vpop.permute.xlu0 %142
    %144 = vrot.lane.b32.xlu0 %v127, 64
    %v145 = vpop.permute.xlu0 %144
    %148 = vst.msk [vmem:[#allocation11] sm:$0xff] %vm85, %v143
    %149 = vst.msk [vmem:[#allocation11 + $0x8] sm:$0xff] %vm85, %v145
    // Predicated region
    $region26: #{multi_head_attention_qkv.1} parent=1 // pred_check
      _
    $region27: #{multi_head_attention_qkv.1} parent=1 // pred_check_branch
      %151 = sbr.rel (0) target = $region29
    $region28: #{multi_head_attention_qkv.1} parent=1 // pred_region
      %s153 = ssub.s32 256, 256
      %154 = vsyncadd [#allocation4], %s153
      %s155 = sshll.u32 [#allocation8], 4
      %s156 = int_to_ptr.vmem [resolvable:$true] %s155
      %161 = dma.vmem_to_hbm [thread:$0]  %s156, 256, %s3, [#allocation4], 128, 128, 8
    $region29: #{multi_head_attention_qkv.1} parent=1 // pred_fallthru
      _
    // Predicated region
    $region30: #{multi_head_attention_qkv.1} parent=1 // pred_check
      _
    $region31: #{multi_head_attention_qkv.1} parent=1 // pred_check_branch
      %163 = sbr.rel (0) target = $region33
    $region32: #{multi_head_attention_qkv.1} parent=1 // pred_region
      %s165 = ssub.s32 256, 256
      %166 = vsyncadd [#allocation10], %s165
      %s167 = sshll.u32 [#allocation9], 4
      %s168 = int_to_ptr.vmem [resolvable:$true] %s167
      %173 = dma.vmem_to_hbm [thread:$0]  %s168, 256, %s4, [#allocation10], 128, 128, 8
    $region33: #{multi_head_attention_qkv.1} parent=1 // pred_fallthru
      _
    // Predicated region
    $region34: #{multi_head_attention_qkv.1} parent=1 // pred_check
      _
    $region35: #{multi_head_attention_qkv.1} parent=1 // pred_check_branch
      %175 = sbr.rel (0) target = $region37
    $region36: #{multi_head_attention_qkv.1} parent=1 // pred_region
      %s177 = ssub.s32 256, 256
      %178 = vsyncadd [#allocation10], %s177
      %s179 = sshll.u32 [#allocation11], 4
      %s180 = int_to_ptr.vmem [resolvable:$true] %s179
      %185 = dma.vmem_to_hbm [thread:$0]  %s180, 256, %s5, [#allocation10], 128, 128, 8
    $region37: #{multi_head_attention_qkv.1} parent=1 // pred_fallthru
      _
    // Predicated region
    $region38: #{multi_head_attention_qkv.1} parent=1 // pred_check
      _
    $region39: #{multi_head_attention_qkv.1} parent=1 // pred_check_branch
      %187 = sbr.rel (0) target = $region41
    $region40: #{multi_head_attention_qkv.1} parent=1 // pred_region
      %188 = dma.done [#allocation4], 256
    $region41: #{multi_head_attention_qkv.1} parent=1 // pred_fallthru
      _
    // Predicated region
    $region42: #{multi_head_attention_qkv.1} parent=1 // pred_check
      _
    $region43: #{multi_head_attention_qkv.1} parent=1 // pred_check_branch
      %190 = sbr.rel (0) target = $region45
    $region44: #{multi_head_attention_qkv.1} parent=1 // pred_region
      %191 = dma.done [#allocation10], 256
    $region45: #{multi_head_attention_qkv.1} parent=1 // pred_fallthru
      _
    // Predicated region
    $region46: #{multi_head_attention_qkv.1} parent=1 // pred_check
      _
    $region47: #{multi_head_attention_qkv.1} parent=1 // pred_check_branch
      %193 = sbr.rel (0) target = $region49
    $region48: #{multi_head_attention_qkv.1} parent=1 // pred_region
      %194 = dma.done [#allocation10], 256
    $region49: #{multi_head_attention_qkv.1} parent=1 // pred_fallthru
      _
    %195 = vsyncpa [#allocation3], 1
    %196 = vsyncpa [#allocation6], 1
    %197 = vsyncpa [#allocation4], 1
    %198 = vsyncpa [#allocation10], 1

// kernel: multi_head_attention_qkv.1
$region0: #{multi_head_attention_qkv.1}
  #allocation0 [shape = 'u32[]', space=smem, size = 0x4, offset = 0x4, fixed_abs, tag = 'smem constant byte address 0x4 - core index']
  #allocation1 [shape = 'u32[144,128]{1,0:T(1,128)}', space=vmem, size = 0x12000, scoped, tag = 'internal scratch']
  %s0 = inlined_call_operand.hbm [shape: f32[16,32], index: 0, kind: input, shape index: {}]
  %s1 = inlined_call_operand.hbm [shape: bf16[32,96], index: 1, kind: input, shape index: {}]
  %s2 = inlined_call_operand.hbm [shape: f32[1,96], index: 2, kind: input, shape index: {}]
  %s3 = inlined_call_operand.hbm [shape: f32[16,32], index: 3, kind: output, shape index: {0}]
  %s4 = inlined_call_operand.hbm [shape: f32[16,32], index: 4, kind: output, shape index: {1}]
  %s5 = inlined_call_operand.hbm [shape: f32[16,32], index: 5, kind: output, shape index: {2}]
  %6 = xla_tuple %s3, %s4, %s5
  %s7 = sld [smem:[#allocation0]]
  $region50: #{multi_head_attention_qkv.1} parent=0
    _
  %s9 = ssub.s32 1, %s7
  %s10 = scalar_select 0, %s9, %s7
  $region1: #{multi_head_attention_qkv.1} parent=0
    #allocation2 [shape = 'u8[8192]{0}', space=vmem, size = 0x2000, scoped, tag = 'input window, operand 0, single buffered']
    #allocation3 [shape = 's32[1]{0}', space=sflag, size = 0x4, scoped, tag = 'scoped memory for multi_head_attention_qkv.1']
    #allocation4 [shape = 's32[1]{0}', space=sflag, size = 0x4, scoped, tag = 'scoped memory for multi_head_attention_qkv.1']
    #allocation5 [shape = 'u8[8192]{0}', space=vmem, size = 0x2000, scoped, tag = 'input window, operand 1, single buffered']
    #allocation6 [shape = 's32[1]{0}', space=sflag, size = 0x4, scoped, tag = 'scoped memory for multi_head_attention_qkv.1']
    #allocation7 [shape = 'u8[512]{0}', space=vmem, size = 0x400, scoped, tag = 'input window, operand 2, single buffered']
    #allocation8 [shape = 'u8[8192]{0}', space=vmem, size = 0x2000, scoped, tag = 'output window, operand 0, single buffered']
    #allocation9 [shape = 'u8[8192]{0}', space=vmem, size = 0x2000, scoped, tag = 'output window, operand 1, single buffered']
    #allocation10 [shape = 's32[1]{0}', space=sflag, size = 0x4, scoped, tag = 'scoped memory for multi_head_attention_qkv.1']
    #allocation11 [shape = 'u8[8192]{0}', space=vmem, size = 0x2000, scoped, tag = 'output window, operand 2, single buffered']
    %11 = vsyncpa [#allocation3], 0
    %12 = vsyncpa [#allocation6], 0
    %13 = vsyncpa [#allocation4], 0
    %14 = vsyncpa [#allocation10], 0
    // Predicated region
    $region2: #{multi_head_attention_qkv.1} parent=1 // pred_check
      _
    $region3: #{multi_head_attention_qkv.1} parent=1 // pred_check_branch
      %16 = sbr.rel (0) target = $region5
    $region4: #{multi_head_attention_qkv.1} parent=1 // pred_region
      %s18 = ssub.s32 256, 256
      %19 = vsyncadd [#allocation3], %s18
      %s20 = sshll.u32 [#allocation2], 4
      %s21 = int_to_ptr.vmem [resolvable:$true] %s20
      %26 = dma.hbm_to_vmem [thread:$0]  %s0, 256, %s21, [#allocation3], 128, 128, 8
    $region5: #{multi_head_attention_qkv.1} parent=1 // pred_fallthru
      _
    // Predicated region
    $region6: #{multi_head_attention_qkv.1} parent=1 // pred_check
      _
    $region7: #{multi_head_attention_qkv.1} parent=1 // pred_check_branch
      %28 = sbr.rel (0) target = $region9
    $region8: #{multi_head_attention_qkv.1} parent=1 // pred_region
      %s30 = ssub.s32 256, 256
      %31 = vsyncadd [#allocation6], %s30
      %s32 = sshll.u32 [#allocation5], 4
      %s33 = int_to_ptr.vmem [resolvable:$true] %s32
      %38 = dma.hbm_to_vmem [thread:$0]  %s1, 256, %s33, [#allocation6], 64, 64, 4
    $region9: #{multi_head_attention_qkv.1} parent=1 // pred_fallthru
      _
    // Predicated region
    $region10: #{multi_head_attention_qkv.1} parent=1 // pred_check
      _
    $region11: #{multi_head_attention_qkv.1} parent=1 // pred_check_branch
      %40 = sbr.rel (0) target = $region13
    $region12: #{multi_head_attention_qkv.1} parent=1 // pred_region
      %s42 = ssub.s32 16, 16
      %43 = vsyncadd [#allocation6], %s42
      %s45 = sshll.u32 [#allocation7], 4
      %s46 = int_to_ptr.vmem [resolvable:$true] %s45
      %48 = dma.hbm_to_vmem [thread:$0]  %s2, 16, %s46, [#allocation6]
    $region13: #{multi_head_attention_qkv.1} parent=1 // pred_fallthru
      _
    // Predicated region
    $region14: #{multi_head_attention_qkv.1} parent=1 // pred_check
      _
    $region15: #{multi_head_attention_qkv.1} parent=1 // pred_check_branch
      %50 = sbr.rel (0) target = $region17
    $region16: #{multi_head_attention_qkv.1} parent=1 // pred_region
      %51 = dma.done [#allocation3], 256
    $region17: #{multi_head_attention_qkv.1} parent=1 // pred_fallthru
      _
    // Predicated region
    $region18: #{multi_head_attention_qkv.1} parent=1 // pred_check
      _
    $region19: #{multi_head_attention_qkv.1} parent=1 // pred_check_branch
      %53 = sbr.rel (0) target = $region21
    $region20: #{multi_head_attention_qkv.1} parent=1 // pred_region
      %54 = dma.done [#allocation6], 256
    $region21: #{multi_head_attention_qkv.1} parent=1 // pred_fallthru
      _
    // Predicated region
    $region22: #{multi_head_attention_qkv.1} parent=1 // pred_check
      _
    $region23: #{multi_head_attention_qkv.1} parent=1 // pred_check_branch
      %56 = sbr.rel (0) target = $region25
    $region24: #{multi_head_attention_qkv.1} parent=1 // pred_region
      %57 = dma.done [#allocation6], 16
    $region25: #{multi_head_attention_qkv.1} parent=1 // pred_fallthru
      _
    %v59 = vld [vmem:[#allocation2] sm:$0xff]
    %v60 = vld [vmem:[#allocation2 + $0x8] sm:$0xff]
    %v61 = vpack.c.bf16 %v60, %v59
    %v62 = vld [vmem:[#allocation5] sm:$0xf]
    %v63 = vld [vmem:[#allocation5 + $0x4] sm:$0xf]
    %v64 = vld [vmem:[#allocation5 + $0x8] sm:$0xf]
    %v65 = vld [vmem:[#allocation5 + $0xc] sm:$0xf]
    %v66 = vld [vmem:[#allocation7] sm:$0x1]
    %v68 = vlaneseq
    %v69 = vshrl.u32 %v68, 7
    %v70 = vsub.s32 0, %v69
    %v71 = vrot.slane %v66, %v70
    %v77 = vunpack.c.l.b16 %v62
    %v78 = vunpack.c.l.b16 %v63
    %v79 = vunpack.c.l.b16 %v64
    %v80 = vunpack.c.l.b16 %v65
    %v81 = vpack.c.b16 %v78, %v77
    %v82 = vpack.c.b16 %v80, %v79
    %vm85 = vcmask 261120
    %v87 = vsel %vm85, %v61, 0
    %89 = vmatprep.subr.bf16.mxu0 0
    %90 = vmatpush1.bf16.msra.mxu0 %v81
    %91 = vmatprep.subr.bf16.mxu0 0
    %92 = vmatpush1.bf16.msra.mxu0 %v82
    %93 = vmatprep.subr.bf16.mxu0 0
    %94 = vmatpush1.bf16.msra.mxu0 0
    %95 = vmatprep.subr.bf16.mxu0 0
    %96 = vmatpush1.bf16.msra.mxu0 0
    %97 = vmatprep.subr.bf16.mxu0 0
    %98 = vmatpush1.bf16.msra.mxu0 0
    %99 = vmatprep.subr.bf16.mxu0 0
    %100 = vmatpush1.bf16.msra.mxu0 0
    %101 = vmatprep.subr.bf16.mxu0 0
    %102 = vmatpush1.bf16.msra.mxu0 0
    %103 = vmatprep.subr.bf16.mxu0 0
    %104 = vmatpush1.bf16.msra.mxu0 0
    %105 = vmatprep.subr.bf16.mxu0 0
    %106 = vmatpush1.bf16.msra.mxu0 0
    %107 = vmatprep.subr.bf16.mxu0 0
    %108 = vmatpush1.bf16.msra.mxu0 0
    %109 = vmatprep.subr.bf16.mxu0 0
    %110 = vmatpush1.bf16.msra.mxu0 0
    %111 = vmatprep.subr.bf16.mxu0 0
    %112 = vmatpush1.bf16.msra.mxu0 0
    %113 = vmatprep.subr.bf16.mxu0 0
    %114 = vmatpush1.bf16.msra.mxu0 0
    %115 = vmatprep.subr.bf16.mxu0 0
    %116 = vmatpush1.bf16.msra.mxu0 0
    %117 = vmatprep.subr.bf16.mxu0 0
    %118 = vmatpush1.bf16.msra.mxu0 0
    %119 = vmatprep.subr.bf16.mxu0 0
    %120 = vmatpush1.bf16.msra.mxu0 0
    %121 = vmatprep.mubr.bf16.mxu0 0
    %122 = vmatmul.mubr.bf16.gmra.mrb[0].mxu0 %v87
    %v123 = vpop.f32.mrb[0].mxu0
    %v124 = vadd.f32 %v71, %v123
    %v125 = vpop.f32.mrb[0].mxu0
    %v126 = vpop.f32.mrb[0].mxu0
    %v127 = vadd.f32 %v71, %v126
    %v128 = vpop.f32.mrb[0].mxu0
    %129 = vdwg.mxu0
    %130 = vst.msk [vmem:[#allocation8] sm:$0xff] %vm85, %v124
    %131 = vst.msk [vmem:[#allocation8 + $0x8] sm:$0xff] %vm85, %v127
    %134 = vrot.lane.b32.xlu0 %v124, 96
    %v135 = vpop.permute.xlu0 %134
    %136 = vrot.lane.b32.xlu0 %v127, 96
    %v137 = vpop.permute.xlu0 %136
    %140 = vst.msk [vmem:[#allocation9] sm:$0xff] %vm85, %v135
    %141 = vst.msk [vmem:[#allocation9 + $0x8] sm:$0xff] %vm85, %v137
    %142 = vrot.lane.b32.xlu0 %v124, 64
    %v143 = vpop.permute.xlu0 %142
    %144 = vrot.lane.b32.xlu0 %v127, 64
    %v145 = vpop.permute.xlu0 %144
    %148 = vst.msk [vmem:[#allocation11] sm:$0xff] %vm85, %v143
    %149 = vst.msk [vmem:[#allocation11 + $0x8] sm:$0xff] %vm85, %v145
    // Predicated region
    $region26: #{multi_head_attention_qkv.1} parent=1 // pred_check
      _
    $region27: #{multi_head_attention_qkv.1} parent=1 // pred_check_branch
      %151 = sbr.rel (0) target = $region29
    $region28: #{multi_head_attention_qkv.1} parent=1 // pred_region
      %s153 = ssub.s32 256, 256
      %154 = vsyncadd [#allocation4], %s153
      %s155 = sshll.u32 [#allocation8], 4
      %s156 = int_to_ptr.vmem [resolvable:$true] %s155
      %161 = dma.vmem_to_hbm [thread:$0]  %s156, 256, %s3, [#allocation4], 128, 128, 8
    $region29: #{multi_head_attention_qkv.1} parent=1 // pred_fallthru
      _
    // Predicated region
    $region30: #{multi_head_attention_qkv.1} parent=1 // pred_check
      _
    $region31: #{multi_head_attention_qkv.1} parent=1 // pred_check_branch
      %163 = sbr.rel (0) target = $region33
    $region32: #{multi_head_attention_qkv.1} parent=1 // pred_region
      %s165 = ssub.s32 256, 256
      %166 = vsyncadd [#allocation10], %s165
      %s167 = sshll.u32 [#allocation9], 4
      %s168 = int_to_ptr.vmem [resolvable:$true] %s167
      %173 = dma.vmem_to_hbm [thread:$0]  %s168, 256, %s4, [#allocation10], 128, 128, 8
    $region33: #{multi_head_attention_qkv.1} parent=1 // pred_fallthru
      _
    // Predicated region
    $region34: #{multi_head_attention_qkv.1} parent=1 // pred_check
      _
    $region35: #{multi_head_attention_qkv.1} parent=1 // pred_check_branch
      %175 = sbr.rel (0) target = $region37
    $region36: #{multi_head_attention_qkv.1} parent=1 // pred_region
      %s177 = ssub.s32 256, 256
      %178 = vsyncadd [#allocation10], %s177
      %s179 = sshll.u32 [#allocation11], 4
      %s180 = int_to_ptr.vmem [resolvable:$true] %s179
      %185 = dma.vmem_to_hbm [thread:$0]  %s180, 256, %s5, [#allocation10], 128, 128, 8
    $region37: #{multi_head_attention_qkv.1} parent=1 // pred_fallthru
      _
    // Predicated region
    $region38: #{multi_head_attention_qkv.1} parent=1 // pred_check
      _
    $region39: #{multi_head_attention_qkv.1} parent=1 // pred_check_branch
      %187 = sbr.rel (0) target = $region41
    $region40: #{multi_head_attention_qkv.1} parent=1 // pred_region
      %188 = dma.done [#allocation4], 256
    $region41: #{multi_head_attention_qkv.1} parent=1 // pred_fallthru
      _
    // Predicated region
    $region42: #{multi_head_attention_qkv.1} parent=1 // pred_check
      _
    $region43: #{multi_head_attention_qkv.1} parent=1 // pred_check_branch
      %190 = sbr.rel (0) target = $region45
    $region44: #{multi_head_attention_qkv.1} parent=1 // pred_region
      %191 = dma.done [#allocation10], 256
    $region45: #{multi_head_attention_qkv.1} parent=1 // pred_fallthru
      _
    // Predicated region
    $region46: #{multi_head_attention_qkv.1} parent=1 // pred_check
      _
    $region47: #{multi_head_attention_qkv.1} parent=1 // pred_check_branch
      %193 = sbr.rel (0) target = $region49
    $region48: #{multi_head_attention_qkv.1} parent=1 // pred_region
      %194 = dma.done [#allocation10], 256
    $region49: #{multi_head_attention_qkv.1} parent=1 // pred_fallthru
      _
    %195 = vsyncpa [#allocation3], 1
    %196 = vsyncpa [#allocation6], 1
    %197 = vsyncpa [#allocation4], 1
    %198 = vsyncpa [#allocation10], 1

</llo_original>
